<compile_context>
chip_gen: v6e
topology: v6e:2x2x1
jax: 0.10.0
libtpu: 0.0.40
codegen_flags: <defaults>
</compile_context>

<pallas_src>
import jax
import jax.numpy as jnp
from jax import lax
from jax.experimental import pallas as pl
from jax.experimental.pallas import tpu as pltpu

IN_F, H1, H2, OUT_F = 200, 100, 10, 2


def _mlp_kernel(x_ref, w1_ref, b1_ref, w2_ref, b2_ref, w3_ref, b3_ref, o_ref):
    # fc1: (tB, 200) @ (200, 100) + b1 -> ReLU.  x/w1 may be bf16; the MXU
    # accumulates in f32 (preferred_element_type), so h1 is f32.
    h1 = jnp.dot(x_ref[...], w1_ref[...], preferred_element_type=jnp.float32)
    h1 = jnp.maximum(h1 + b1_ref[...], 0.0)

    # fc2: (tB, 100) @ (100, 10) + b2 -> ReLU
    h2 = jnp.dot(h1, w2_ref[...], preferred_element_type=jnp.float32)
    h2 = jnp.maximum(h2 + b2_ref[...], 0.0)

    # fc3, computed directly in transposed (lane-dense) form:
    #   (2, tB) = contract w3 (10, 2) dim 0 with h2 (tB, 10) dim 1.
    h3t = lax.dot_general(
        w3_ref[...], h2,
        dimension_numbers=(((0,), (1,)), ((), ())),
        preferred_element_type=jnp.float32)
    o_ref[...] = (h3t + b3_ref[...]).astype(o_ref.dtype)  # b3 stored as (2, 1)


def _round_up(v, m):
    return ((v + m - 1) // m) * m


def net_forward(x, params, *, tile_b=4096, min_grid_batch=512):
    """Forward pass of Net. x: (B, 200). Returns (B, 2) f32.

    fc1 runs in x.dtype (pass bf16 x only if it already lives in HBM as bf16);
    accumulation and fc2/fc3 stay f32.
    """
    w1, b1, w2, b2, w3, b3 = params
    B = x.shape[0]

    # Match w1 to the caller-provided x dtype (w1 is tiny: 200x100).
    if w1.dtype != x.dtype:
        w1 = w1.astype(x.dtype)
    args = (x, w1, b1, w2, b2, w3, b3)

    cost = pl.CostEstimate(
        flops=2 * B * (IN_F * H1 + H1 * H2 + H2 * OUT_F),
        transcendentals=0,
        bytes_accessed=sum(int(a.size) * a.dtype.itemsize for a in args)
        + B * OUT_F * 4,
    )

    if B <= min_grid_batch:
        # Small batch: single VMEM-resident block per operand, no grid,
        # no pipeline bookkeeping, no double buffering.
        vmem = pl.BlockSpec(memory_space=pltpu.MemorySpace.VMEM)
        out_t = pl.pallas_call(
            _mlp_kernel,
            out_shape=jax.ShapeDtypeStruct((OUT_F, B), jnp.float32),
            in_specs=[vmem] * 7,
            out_specs=vmem,
            cost_estimate=cost,
        )(*args)
        return out_t.T

    # Grid path: tile over the batch only; cap the tile so there are always
    # >= 2 tiles (feeds both v7x TensorCores) and keep it a multiple of 128 so
    # the lane-dense (2, tile) output block stays aligned.
    tile = min(tile_b, _round_up(pl.cdiv(B, 2), 128))
    n_tiles = pl.cdiv(B, tile)  # ragged last tile is masked by Pallas

    def resident(shape):  # weights/biases: fetched once, never re-fetched
        n = len(shape)
        return pl.BlockSpec(shape, lambda i, n=n: (0,) * n)

    out_t = pl.pallas_call(
        _mlp_kernel,
        out_shape=jax.ShapeDtypeStruct((OUT_F, B), jnp.float32),
        grid=(n_tiles,),
        in_specs=[
            pl.BlockSpec((tile, IN_F), lambda i: (i, 0)),  # x: batch-tiled
            resident(w1.shape), resident(b1.shape),
            resident(w2.shape), resident(b2.shape),
            resident(w3.shape), resident(b3.shape),
        ],
        out_specs=pl.BlockSpec((OUT_F, tile), lambda i: (0, i)),  # lane-dense
        compiler_params=pltpu.CompilerParams(
            # Batch tiles are independent -> shard across v7x's 2 TensorCores;
            # harmless on single-TC v5e/v6e.
            dimension_semantics=("parallel",)),
        cost_estimate=cost,
    )(*args)
    return out_t.T


def init_params(key):
    """Deterministic init mimicking PyTorch Linear (uniform +/- 1/sqrt(fan_in)).

    Weights stored transposed as (in_features, out_features); b1/b2 as
    (1, out) for broadcasting; b3 as (2, 1) to match the transposed output.
    """
    def linear(k, fan_in, fan_out, bias_shape):
        kw, kb = jax.random.split(k)
        bound = float(fan_in) ** -0.5
        w = jax.random.uniform(kw, (fan_in, fan_out), jnp.float32, -bound, bound)
        b = jax.random.uniform(kb, bias_shape, jnp.float32, -bound, bound)
        return w, b

    k1, k2, k3 = jax.random.split(key, 3)
    w1, b1 = linear(k1, IN_F, H1, (1, H1))
    w2, b2 = linear(k2, H1, H2, (1, H2))
    w3, b3 = linear(k3, H2, OUT_F, (OUT_F, 1))
    return (w1, b1, w2, b2, w3, b3)


def reference_forward(x, params):
    w1, b1, w2, b2, w3, b3 = params
    hi = lax.Precision.HIGHEST
    x = x.astype(jnp.float32)
    h = jnp.maximum(jnp.dot(x, w1.astype(jnp.float32), precision=hi) + b1, 0.0)
    h = jnp.maximum(jnp.dot(h, w2, precision=hi) + b2, 0.0)
    return jnp.dot(h, w3, precision=hi) + b3.T


if __name__ == "__main__":
    key = jax.random.PRNGKey(0)
    k_params, k_x1, k_x2 = jax.random.split(key, 3)
    params = init_params(k_params)

    # 1) Small-batch path: no grid, every operand a single VMEM block, f32.
    x_small = jax.random.normal(k_x1, (8, IN_F), jnp.float32)
    out_small = jax.block_until_ready(net_forward(x_small, params))
    ref_small = reference_forward(x_small, params)
    assert out_small.shape == (8, OUT_F), out_small.shape
    assert jnp.allclose(out_small, ref_small, atol=1e-3, rtol=1e-3), \
        "small-batch mismatch vs reference"

    # 2) Grid path with a ragged last tile (no wrapper-side padding) and >= 2
    #    tiles (exercises megacore sharding on v7x). Small tile here just to
    #    exercise the path; production default is tile_b=4096.
    x_big = jax.random.normal(k_x2, (300, IN_F), jnp.float32)
    out_big = jax.block_until_ready(
        net_forward(x_big, params, tile_b=128, min_grid_batch=64))
    ref_big = reference_forward(x_big, params)
    assert out_big.shape == (300, OUT_F), out_big.shape
    assert jnp.allclose(out_big, ref_big, atol=1e-3, rtol=1e-3), \
        "tiled/ragged mismatch vs reference"

    # 3) Caller-provided bf16 input (no wrapper-side cast pass over HBM).
    x_bf16 = x_small.astype(jnp.bfloat16)
    out_bf16 = jax.block_until_ready(net_forward(x_bf16, params))
    ref_bf16 = reference_forward(x_bf16.astype(jnp.float32), params)
    assert out_bf16.shape == (8, OUT_F), out_bf16.shape
    assert jnp.allclose(out_bf16, ref_bf16, atol=5e-2, rtol=5e-2), \
        "bf16 mismatch vs reference"

    print("KERNEL_OK")
</pallas_src>

<mosaic_0001>
module attributes {stable_mosaic.version = 11 : i64} {
  func.func @_mlp_kernel(%arg0: memref<8x200xf32, #tpu.memory_space<vmem>>, %arg1: memref<200x100xf32, #tpu.memory_space<vmem>>, %arg2: memref<1x100xf32, #tpu.memory_space<vmem>>, %arg3: memref<100x10xf32, #tpu.memory_space<vmem>>, %arg4: memref<1x10xf32, #tpu.memory_space<vmem>>, %arg5: memref<10x2xf32, #tpu.memory_space<vmem>>, %arg6: memref<2x1xf32, #tpu.memory_space<vmem>>, %arg7: memref<2x8xf32, #tpu.memory_space<vmem>>) attributes {dimension_semantics = [], scalar_prefetch = 0 : i64, scratch_operands = 0 : i64, tpu.core_type = #tpu.core_type<tc>} {
    %c0 = arith.constant 0 : index
    %c0_0 = arith.constant 0 : index
    %0 = vector.load %arg0[%c0, %c0_0] : memref<8x200xf32, #tpu.memory_space<vmem>>, vector<8x200xf32>
    %c0_1 = arith.constant 0 : index
    %c0_2 = arith.constant 0 : index
    %1 = vector.load %arg1[%c0_1, %c0_2] : memref<200x100xf32, #tpu.memory_space<vmem>>, vector<200x100xf32>
    %cst = arith.constant dense<0.000000e+00> : vector<8x100xf32>
    %2 = tpu.matmul %0, %1, %cst {dimension_numbers = #tpu.dot_dimension_numbers<[1], [0], [0], [1], [0, 0, 1, 1], [], []>} : vector<8x200xf32>, vector<200x100xf32>, vector<8x100xf32> -> vector<8x100xf32>
    %c0_3 = arith.constant 0 : index
    %c0_4 = arith.constant 0 : index
    %3 = vector.load %arg2[%c0_3, %c0_4] : memref<1x100xf32, #tpu.memory_space<vmem>>, vector<1x100xf32>
    %4 = vector.broadcast %3 : vector<1x100xf32> to vector<8x100xf32>
    %5 = arith.addf %2, %4 : vector<8x100xf32>
    %cst_5 = arith.constant 0.000000e+00 : f32
    %6 = vector.broadcast %cst_5 : f32 to vector<8x100xf32>
    %7 = arith.maximumf %5, %6 : vector<8x100xf32>
    %c0_6 = arith.constant 0 : index
    %c0_7 = arith.constant 0 : index
    %8 = vector.load %arg3[%c0_6, %c0_7] : memref<100x10xf32, #tpu.memory_space<vmem>>, vector<100x10xf32>
    %cst_8 = arith.constant dense<0.000000e+00> : vector<8x10xf32>
    %9 = tpu.matmul %7, %8, %cst_8 {dimension_numbers = #tpu.dot_dimension_numbers<[1], [0], [0], [1], [0, 0, 1, 1], [], []>} : vector<8x100xf32>, vector<100x10xf32>, vector<8x10xf32> -> vector<8x10xf32>
    %c0_9 = arith.constant 0 : index
    %c0_10 = arith.constant 0 : index
    %10 = vector.load %arg4[%c0_9, %c0_10] : memref<1x10xf32, #tpu.memory_space<vmem>>, vector<1x10xf32>
    %11 = vector.broadcast %10 : vector<1x10xf32> to vector<8x10xf32>
    %12 = arith.addf %9, %11 : vector<8x10xf32>
    %cst_11 = arith.constant 0.000000e+00 : f32
    %13 = vector.broadcast %cst_11 : f32 to vector<8x10xf32>
    %14 = arith.maximumf %12, %13 : vector<8x10xf32>
    %c0_12 = arith.constant 0 : index
    %c0_13 = arith.constant 0 : index
    %15 = vector.load %arg5[%c0_12, %c0_13] : memref<10x2xf32, #tpu.memory_space<vmem>>, vector<10x2xf32>
    %cst_14 = arith.constant dense<0.000000e+00> : vector<2x8xf32>
    %16 = tpu.matmul %15, %14, %cst_14 {dimension_numbers = #tpu.dot_dimension_numbers<[0], [1], [1], [0], [0, 1, 1, 0], [], []>} : vector<10x2xf32>, vector<8x10xf32>, vector<2x8xf32> -> vector<2x8xf32>
    %c0_15 = arith.constant 0 : index
    %c0_16 = arith.constant 0 : index
    %17 = vector.load %arg6[%c0_15, %c0_16] : memref<2x1xf32, #tpu.memory_space<vmem>>, vector<2x1xf32>
    %18 = vector.broadcast %17 : vector<2x1xf32> to vector<2x8xf32>
    %19 = arith.addf %16, %18 : vector<2x8xf32>
    %c0_17 = arith.constant 0 : index
    %c0_18 = arith.constant 0 : index
    %20 = vector.load %arg7[%c0_17, %c0_18] : memref<2x8xf32, #tpu.memory_space<vmem>>, vector<2x8xf32>
    tpu.vector_store %arg7[%c0_17, %c0_18], %19 {strides = array<i32>} : memref<2x8xf32, #tpu.memory_space<vmem>>, vector<2x8xf32>,
    return
  }
}

</mosaic_0001>

<llo_original>
// kernel: tpu_custom_call.1
$region0: #{tpu_custom_call.1}
  #allocation0 [shape = 'u32[]', space=smem, size = 0x4, offset = 0x4, fixed_abs, tag = 'smem constant byte address 0x4 - core index']
  #allocation1 [shape = 'u32[144,128]{1,0:T(1,128)}', space=vmem, size = 0x12000, scoped, tag = 'internal scratch']
  %s0 = inlined_call_operand.vmem [shape: f32[8,200], index: 0, kind: input, shape index: {}]
  %s1 = inlined_call_operand.hbm [shape: f32[200,100], index: 1, kind: input, shape index: {}]
  %s2 = inlined_call_operand.vmem [shape: f32[1,100], index: 2, kind: input, shape index: {}]
  %s3 = inlined_call_operand.vmem [shape: f32[100,10], index: 3, kind: input, shape index: {}]
  %s4 = inlined_call_operand.vmem [shape: f32[1,10], index: 4, kind: input, shape index: {}]
  %s5 = inlined_call_operand.vmem [shape: f32[10,2], index: 5, kind: input, shape index: {}]
  %s6 = inlined_call_operand.vmem [shape: f32[2,1], index: 6, kind: input, shape index: {}]
  %s7 = inlined_call_operand.hbm [shape: f32[2,8], index: 7, kind: output, shape index: {}]
  %s8 = sld [smem:[#allocation0]]
  $region42: #{tpu_custom_call.1} parent=0
    _
  %s10 = ssub.s32 1, %s8
  %s11 = scalar_select 0, %s10, %s8
  $region1: #{tpu_custom_call.1} parent=0
    #allocation2 [shape = 'u8[102400]{0}', space=vmem, size = 0x19000, scoped, tag = 'input window, operand 1, single buffered']
    #allocation3 [shape = 's32[1]{0}', space=sflag, size = 0x4, scoped, tag = 'scoped memory for tpu_custom_call.1']
    #allocation4 [shape = 's32[1]{0}', space=sflag, size = 0x4, scoped, tag = 'scoped memory for tpu_custom_call.1']
    #allocation5 [shape = 'u8[1024]{0}', space=vmem, size = 0x400, scoped, tag = 'output window, operand 0, single buffered']
    %12 = vsyncpa [#allocation3], 0
    %13 = vsyncpa [#allocation4], 0
    // Predicated region
    $region2: #{tpu_custom_call.1} parent=1 // pred_check
      _
    $region3: #{tpu_custom_call.1} parent=1 // pred_check_branch
      %15 = sbr.rel (0) target = $region5
    $region4: #{tpu_custom_call.1} parent=1 // pred_region
      _
    $region5: #{tpu_custom_call.1} parent=1 // pred_fallthru
      _
    // Predicated region
    $region6: #{tpu_custom_call.1} parent=1 // pred_check
      _
    $region7: #{tpu_custom_call.1} parent=1 // pred_check_branch
      %17 = sbr.rel (0) target = $region9
    $region8: #{tpu_custom_call.1} parent=1 // pred_region
      %s19 = ssub.s32 3200, 3200
      %20 = vsyncadd [#allocation3], %s19
      %s21 = sshll.u32 [#allocation2], 4
      %s22 = int_to_ptr.vmem [resolvable:$true] %s21
      %27 = dma.hbm_to_vmem [thread:$0]  %s1, 3200, %s22, [#allocation3], 128, 128, 8
    $region9: #{tpu_custom_call.1} parent=1 // pred_fallthru
      _
    // Predicated region
    $region10: #{tpu_custom_call.1} parent=1 // pred_check
      _
    $region11: #{tpu_custom_call.1} parent=1 // pred_check_branch
      %29 = sbr.rel (0) target = $region13
    $region12: #{tpu_custom_call.1} parent=1 // pred_region
      _
    $region13: #{tpu_custom_call.1} parent=1 // pred_fallthru
      _
    // Predicated region
    $region14: #{tpu_custom_call.1} parent=1 // pred_check
      _
    $region15: #{tpu_custom_call.1} parent=1 // pred_check_branch
      %31 = sbr.rel (0) target = $region17
    $region16: #{tpu_custom_call.1} parent=1 // pred_region
      _
    $region17: #{tpu_custom_call.1} parent=1 // pred_fallthru
      _
    // Predicated region
    $region18: #{tpu_custom_call.1} parent=1 // pred_check
      _
    $region19: #{tpu_custom_call.1} parent=1 // pred_check_branch
      %33 = sbr.rel (0) target = $region21
    $region20: #{tpu_custom_call.1} parent=1 // pred_region
      _
    $region21: #{tpu_custom_call.1} parent=1 // pred_fallthru
      _
    // Predicated region
    $region22: #{tpu_custom_call.1} parent=1 // pred_check
      _
    $region23: #{tpu_custom_call.1} parent=1 // pred_check_branch
      %35 = sbr.rel (0) target = $region25
    $region24: #{tpu_custom_call.1} parent=1 // pred_region
      _
    $region25: #{tpu_custom_call.1} parent=1 // pred_fallthru
      _
    // Predicated region
    $region26: #{tpu_custom_call.1} parent=1 // pred_check
      _
    $region27: #{tpu_custom_call.1} parent=1 // pred_check_branch
      %37 = sbr.rel (0) target = $region29
    $region28: #{tpu_custom_call.1} parent=1 // pred_region
      _
    $region29: #{tpu_custom_call.1} parent=1 // pred_fallthru
      _
    // Predicated region
    $region30: #{tpu_custom_call.1} parent=1 // pred_check
      _
    $region31: #{tpu_custom_call.1} parent=1 // pred_check_branch
      %39 = sbr.rel (0) target = $region33
    $region32: #{tpu_custom_call.1} parent=1 // pred_region
      %40 = dma.done [#allocation3], 3200
    $region33: #{tpu_custom_call.1} parent=1 // pred_fallthru
      _
    %v41 = vld [vmem:[%s0] sm:$0xff]
    %v42 = vld [vmem:[%s0 + $0x8] sm:$0xff]
    %v43 = vld [vmem:[#allocation2] sm:$0xff]
    %v44 = vld [vmem:[#allocation2 + $0x8] sm:$0xff]
    %v45 = vld [vmem:[#allocation2 + $0x10] sm:$0xff]
    %v46 = vld [vmem:[#allocation2 + $0x18] sm:$0xff]
    %v47 = vld [vmem:[#allocation2 + $0x20] sm:$0xff]
    %v48 = vld [vmem:[#allocation2 + $0x28] sm:$0xff]
    %v49 = vld [vmem:[#allocation2 + $0x30] sm:$0xff]
    %v50 = vld [vmem:[#allocation2 + $0x38] sm:$0xff]
    %v51 = vld [vmem:[#allocation2 + $0x40] sm:$0xff]
    %v52 = vld [vmem:[#allocation2 + $0x48] sm:$0xff]
    %v53 = vld [vmem:[#allocation2 + $0x50] sm:$0xff]
    %v54 = vld [vmem:[#allocation2 + $0x58] sm:$0xff]
    %v55 = vld [vmem:[#allocation2 + $0x60] sm:$0xff]
    %v56 = vld [vmem:[#allocation2 + $0x68] sm:$0xff]
    %v57 = vld [vmem:[#allocation2 + $0x70] sm:$0xff]
    %v58 = vld [vmem:[#allocation2 + $0x78] sm:$0xff]
    %v59 = vld [vmem:[#allocation2 + $0x80] sm:$0xff]
    %v60 = vld [vmem:[#allocation2 + $0x88] sm:$0xff]
    %v61 = vld [vmem:[#allocation2 + $0x90] sm:$0xff]
    %v62 = vld [vmem:[#allocation2 + $0x98] sm:$0xff]
    %v63 = vld [vmem:[#allocation2 + $0xa0] sm:$0xff]
    %v64 = vld [vmem:[#allocation2 + $0xa8] sm:$0xff]
    %v65 = vld [vmem:[#allocation2 + $0xb0] sm:$0xff]
    %v66 = vld [vmem:[#allocation2 + $0xb8] sm:$0xff]
    %v67 = vld [vmem:[#allocation2 + $0xc0] sm:$0xff]
    %v68 = vld [vmem:[%s2] sm:$0x1]
    %v70 = vlaneseq
    %v71 = vshrl.u32 %v70, 7
    %v72 = vsub.s32 0, %v71
    %v73 = vrot.slane %v68, %v72
    %vm75 = vcmask 588800
    %v77 = vsel %vm75, %v42, 0
    %79 = vmatprep.subr.mxu0 0.0
    %80 = vmatpush1.msra.mxu0 %v58
    %81 = vmatprep.subr.mxu0 0.0
    %82 = vmatpush1.msra.mxu0 %v57
    %83 = vmatprep.subr.mxu0 0.0
    %84 = vmatpush1.msra.mxu0 %v56
    %85 = vmatprep.subr.mxu0 0.0
    %86 = vmatpush1.msra.mxu0 %v55
    %87 = vmatprep.subr.mxu0 0.0
    %88 = vmatpush1.msra.mxu0 %v54
    %89 = vmatprep.subr.mxu0 0.0
    %90 = vmatpush1.msra.mxu0 %v53
    %91 = vmatprep.subr.mxu0 0.0
    %92 = vmatpush1.msra.mxu0 %v52
    %93 = vmatprep.subr.mxu0 0.0
    %94 = vmatpush1.msra.mxu0 %v51
    %95 = vmatprep.subr.mxu0 0.0
    %96 = vmatpush1.msra.mxu0 %v50
    %97 = vmatprep.subr.mxu0 0.0
    %98 = vmatpush1.msra.mxu0 %v49
    %99 = vmatprep.subr.mxu0 0.0
    %100 = vmatpush1.msra.mxu0 %v48
    %101 = vmatprep.subr.mxu0 0.0
    %102 = vmatpush1.msra.mxu0 %v47
    %103 = vmatprep.subr.mxu0 0.0
    %104 = vmatpush1.msra.mxu0 %v46
    %105 = vmatprep.subr.mxu0 0.0
    %106 = vmatpush1.msra.mxu0 %v45
    %107 = vmatprep.subr.mxu0 0.0
    %108 = vmatpush1.msra.mxu0 %v44
    %109 = vmatprep.subr.mxu0 0.0
    %110 = vmatpush1.msra.mxu0 %v43
    %111 = vmatprep.subr.mxu0 0.0
    %112 = vmatpush2.msra.mxu0 0.0
    %113 = vmatprep.subr.mxu0 0.0
    %114 = vmatpush2.msra.mxu0 0.0
    %115 = vmatprep.subr.mxu0 0.0
    %116 = vmatpush2.msra.mxu0 0.0
    %117 = vmatprep.subr.mxu0 0.0
    %118 = vmatpush2.msra.mxu0 0.0
    %119 = vmatprep.subr.mxu0 0.0
    %120 = vmatpush2.msra.mxu0 0.0
    %121 = vmatprep.subr.mxu0 0.0
    %122 = vmatpush2.msra.mxu0 0.0
    %123 = vmatprep.subr.mxu0 0.0
    %124 = vmatpush2.msra.mxu0 0.0
    %125 = vmatprep.subr.mxu0 0.0
    %126 = vmatpush2.msra.mxu0 %v67
    %127 = vmatprep.subr.mxu0 0.0
    %128 = vmatpush2.msra.mxu0 %v66
    %129 = vmatprep.subr.mxu0 0.0
    %130 = vmatpush2.msra.mxu0 %v65
    %131 = vmatprep.subr.mxu0 0.0
    %132 = vmatpush2.msra.mxu0 %v64
    %133 = vmatprep.subr.mxu0 0.0
    %134 = vmatpush2.msra.mxu0 %v63
    %135 = vmatprep.subr.mxu0 0.0
    %136 = vmatpush2.msra.mxu0 %v62
    %137 = vmatprep.subr.mxu0 0.0
    %138 = vmatpush2.msra.mxu0 %v61
    %139 = vmatprep.subr.mxu0 0.0
    %140 = vmatpush2.msra.mxu0 %v60
    %141 = vmatprep.subr.mxu0 0.0
    %142 = vmatpush2.msra.mxu0 %v59
    %143 = vmatprep.mubr.f32.mxu0 %v77
    %144 = vmatmul.mubr.f32.gmra.mxu0 %v41
    %v145 = vpop.f32.mrf.mxu0
    %v146 = vadd.f32 %v73, %v145
    %v147 = vpop.f32.mrf.mxu0
    %148 = vdwg.mxu0
    %v149 = vmax.f32 %v146, 0.0
    %v150 = vld [vmem:[%s3] sm:$0xff]
    %v151 = vld [vmem:[%s3 + $0x8] sm:$0xff]
    %v152 = vld [vmem:[%s3 + $0x10] sm:$0xff]
    %v153 = vld [vmem:[%s3 + $0x18] sm:$0xff]
    %v154 = vld [vmem:[%s3 + $0x20] sm:$0xff]
    %v155 = vld [vmem:[%s3 + $0x28] sm:$0xff]
    %v156 = vld [vmem:[%s3 + $0x30] sm:$0xff]
    %v157 = vld [vmem:[%s3 + $0x38] sm:$0xff]
    %v158 = vld [vmem:[%s3 + $0x40] sm:$0xff]
    %v159 = vld [vmem:[%s3 + $0x48] sm:$0xff]
    %v160 = vld [vmem:[%s3 + $0x50] sm:$0xff]
    %v161 = vld [vmem:[%s3 + $0x58] sm:$0xff]
    %v162 = vld [vmem:[%s3 + $0x60] sm:$0xf]
    %v163 = vld [vmem:[%s4] sm:$0x1]
    %v165 = vlaneseq
    %v166 = vshrl.u32 %v165, 7
    %v167 = vsub.s32 0, %v166
    %v168 = vrot.slane %v163, %v167
    %vm170 = vcmask 818176
    %v172 = vsel %vm170, %v149, 0
    %vm174 = vcmask 1043456
    %v176 = vsel %vm174, %v162, 0
    %178 = vmatprep.subr.mxu0 0.0
    %179 = vmatpush1.msra.mxu0 0.0
    %180 = vmatprep.subr.mxu0 0.0
    %181 = vmatpush1.msra.mxu0 0.0
    %182 = vmatprep.subr.mxu0 0.0
    %183 = vmatpush1.msra.mxu0 0.0
    %184 = vmatprep.subr.mxu0 0.0
    %185 = vmatpush1.msra.mxu0 %v176
    %186 = vmatprep.subr.mxu0 0.0
    %187 = vmatpush1.msra.mxu0 %v161
    %188 = vmatprep.subr.mxu0 0.0
    %189 = vmatpush1.msra.mxu0 %v160
    %190 = vmatprep.subr.mxu0 0.0
    %191 = vmatpush1.msra.mxu0 %v159
    %192 = vmatprep.subr.mxu0 0.0
    %193 = vmatpush1.msra.mxu0 %v158
    %194 = vmatprep.subr.mxu0 0.0
    %195 = vmatpush1.msra.mxu0 %v157
    %196 = vmatprep.subr.mxu0 0.0
    %197 = vmatpush1.msra.mxu0 %v156
    %198 = vmatprep.subr.mxu0 0.0
    %199 = vmatpush1.msra.mxu0 %v155
    %200 = vmatprep.subr.mxu0 0.0
    %201 = vmatpush1.msra.mxu0 %v154
    %202 = vmatprep.subr.mxu0 0.0
    %203 = vmatpush1.msra.mxu0 %v153
    %204 = vmatprep.subr.mxu0 0.0
    %205 = vmatpush1.msra.mxu0 %v152
    %206 = vmatprep.subr.mxu0 0.0
    %207 = vmatpush1.msra.mxu0 %v151
    %208 = vmatprep.subr.mxu0 0.0
    %209 = vmatpush1.msra.mxu0 %v150
    %210 = vmatprep.subr.mxu0 0.0
    %211 = vmatpush2.msra.mxu0 0.0
    %212 = vmatprep.subr.mxu0 0.0
    %213 = vmatpush2.msra.mxu0 0.0
    %214 = vmatprep.subr.mxu0 0.0
    %215 = vmatpush2.msra.mxu0 0.0
    %216 = vmatprep.subr.mxu0 0.0
    %217 = vmatpush2.msra.mxu0 0.0
    %218 = vmatprep.subr.mxu0 0.0
    %219 = vmatpush2.msra.mxu0 0.0
    %220 = vmatprep.subr.mxu0 0.0
    %221 = vmatpush2.msra.mxu0 0.0
    %222 = vmatprep.subr.mxu0 0.0
    %223 = vmatpush2.msra.mxu0 0.0
    %224 = vmatprep.subr.mxu0 0.0
    %225 = vmatpush2.msra.mxu0 0.0
    %226 = vmatprep.subr.mxu0 0.0
    %227 = vmatpush2.msra.mxu0 0.0
    %228 = vmatprep.subr.mxu0 0.0
    %229 = vmatpush2.msra.mxu0 0.0
    %230 = vmatprep.subr.mxu0 0.0
    %231 = vmatpush2.msra.mxu0 0.0
    %232 = vmatprep.subr.mxu0 0.0
    %233 = vmatpush2.msra.mxu0 0.0
    %234 = vmatprep.subr.mxu0 0.0
    %235 = vmatpush2.msra.mxu0 0.0
    %236 = vmatprep.subr.mxu0 0.0
    %237 = vmatpush2.msra.mxu0 0.0
    %238 = vmatprep.subr.mxu0 0.0
    %239 = vmatpush2.msra.mxu0 0.0
    %240 = vmatprep.subr.mxu0 0.0
    %241 = vmatpush2.msra.mxu0 0.0
    %242 = vmatprep.mubr.f32.mxu0 0.0
    %243 = vmatmul.mubr.f32.gmra.mxu0 %v172
    %v244 = vpop.f32.mrf.mxu0
    %v245 = vadd.f32 %v168, %v244
    %v246 = vpop.f32.mrf.mxu0
    %247 = vdwg.mxu0
    %v248 = vmax.f32 %v245, 0.0
    %v249 = vld [vmem:[%s5] sm:$0xff]
    %v250 = vld [vmem:[%s5 + $0x8] sm:$0x3]
    %v251 = vld [vmem:[%s6] sm:$0x3]
    %253 = vset.pattern.permute.xlu0 0
    %254 = vperm.xlu0 %253, %v251
    %v255 = vpop.permute.xlu0 %254
    %257 = vxpose.xlu0.b32.start [1/16] %v249, 128
    %258 = vxpose.xlu0.b32.cont [2/16] %v250, 128
    %259 = vxpose.xlu0.b32.cont [3/16] 0.0, 128
    %260 = vxpose.xlu0.b32.cont [4/16] 0.0, 128
    %261 = vxpose.xlu0.b32.cont [5/16] 0.0, 128
    %262 = vxpose.xlu0.b32.cont [6/16] 0.0, 128
    %263 = vxpose.xlu0.b32.cont [7/16] 0.0, 128
    %264 = vxpose.xlu0.b32.cont [8/16] 0.0, 128
    %265 = vxpose.xlu0.b32.cont [9/16] 0.0, 128
    %266 = vxpose.xlu0.b32.cont [10/16] 0.0, 128
    %267 = vxpose.xlu0.b32.cont [11/16] 0.0, 128
    %268 = vxpose.xlu0.b32.cont [12/16] 0.0, 128
    %269 = vxpose.xlu0.b32.cont [13/16] 0.0, 128
    %270 = vxpose.xlu0.b32.cont [14/16] 0.0, 128
    %271 = vxpose.xlu0.b32.cont [15/16] 0.0, 128
    %272 = vxpose.xlu0.b32.end [16/16] 0.0, 128
    %v273 = vpop.trf.xlu0
    %v274 = vpop.trf.xlu0
    %v275 = vpop.trf.xlu0
    %v276 = vpop.trf.xlu0
    %v277 = vpop.trf.xlu0
    %v278 = vpop.trf.xlu0
    %v279 = vpop.trf.xlu0
    %v280 = vpop.trf.xlu0
    %v281 = vpop.trf.xlu0
    %v282 = vpop.trf.xlu0
    %v283 = vpop.trf.xlu0
    %v284 = vpop.trf.xlu0
    %v285 = vpop.trf.xlu0
    %v286 = vpop.trf.xlu0
    %v287 = vpop.trf.xlu0
    %v288 = vpop.trf.xlu0
    %vm289 = vcmask 80896
    %v291 = vsel %vm289, %v273, 0
    %v294 = vsel %vm289, %v248, 0
    %296 = vmatprep.subr.mxu0 0.0
    %297 = vmatpush1.xpose.msra.mxu0 0.0
    %298 = vmatprep.subr.mxu0 0.0
    %299 = vmatpush1.xpose.msra.mxu0 0.0
    %300 = vmatprep.subr.mxu0 0.0
    %301 = vmatpush1.xpose.msra.mxu0 0.0
    %302 = vmatprep.subr.mxu0 0.0
    %303 = vmatpush1.xpose.msra.mxu0 0.0
    %304 = vmatprep.subr.mxu0 0.0
    %305 = vmatpush1.xpose.msra.mxu0 0.0
    %306 = vmatprep.subr.mxu0 0.0
    %307 = vmatpush1.xpose.msra.mxu0 0.0
    %308 = vmatprep.subr.mxu0 0.0
    %309 = vmatpush1.xpose.msra.mxu0 0.0
    %310 = vmatprep.subr.mxu0 0.0
    %311 = vmatpush1.xpose.msra.mxu0 0.0
    %312 = vmatprep.subr.mxu0 0.0
    %313 = vmatpush1.xpose.msra.mxu0 0.0
    %314 = vmatprep.subr.mxu0 0.0
    %315 = vmatpush1.xpose.msra.mxu0 0.0
    %316 = vmatprep.subr.mxu0 0.0
    %317 = vmatpush1.xpose.msra.mxu0 0.0
    %318 = vmatprep.subr.mxu0 0.0
    %319 = vmatpush1.xpose.msra.mxu0 0.0
    %320 = vmatprep.subr.mxu0 0.0
    %321 = vmatpush1.xpose.msra.mxu0 0.0
    %322 = vmatprep.subr.mxu0 0.0
    %323 = vmatpush1.xpose.msra.mxu0 0.0
    %324 = vmatprep.subr.mxu0 0.0
    %325 = vmatpush1.xpose.msra.mxu0 0.0
    %326 = vmatprep.subr.mxu0 0.0
    %327 = vmatpush1.xpose.msra.mxu0 %v294
    %328 = vmatprep.subr.mxu0 0.0
    %329 = vmatpush2.xpose.msra.mxu0 0.0
    %330 = vmatprep.subr.mxu0 0.0
    %331 = vmatpush2.xpose.msra.mxu0 0.0
    %332 = vmatprep.subr.mxu0 0.0
    %333 = vmatpush2.xpose.msra.mxu0 0.0
    %334 = vmatprep.subr.mxu0 0.0
    %335 = vmatpush2.xpose.msra.mxu0 0.0
    %336 = vmatprep.subr.mxu0 0.0
    %337 = vmatpush2.xpose.msra.mxu0 0.0
    %338 = vmatprep.subr.mxu0 0.0
    %339 = vmatpush2.xpose.msra.mxu0 0.0
    %340 = vmatprep.subr.mxu0 0.0
    %341 = vmatpush2.xpose.msra.mxu0 0.0
    %342 = vmatprep.subr.mxu0 0.0
    %343 = vmatpush2.xpose.msra.mxu0 0.0
    %344 = vmatprep.subr.mxu0 0.0
    %345 = vmatpush2.xpose.msra.mxu0 0.0
    %346 = vmatprep.subr.mxu0 0.0
    %347 = vmatpush2.xpose.msra.mxu0 0.0
    %348 = vmatprep.subr.mxu0 0.0
    %349 = vmatpush2.xpose.msra.mxu0 0.0
    %350 = vmatprep.subr.mxu0 0.0
    %351 = vmatpush2.xpose.msra.mxu0 0.0
    %352 = vmatprep.subr.mxu0 0.0
    %353 = vmatpush2.xpose.msra.mxu0 0.0
    %354 = vmatprep.subr.mxu0 0.0
    %355 = vmatpush2.xpose.msra.mxu0 0.0
    %356 = vmatprep.subr.mxu0 0.0
    %357 = vmatpush2.xpose.msra.mxu0 0.0
    %358 = vmatprep.subr.mxu0 0.0
    %359 = vmatpush2.xpose.msra.mxu0 0.0
    %360 = vmatprep.mubr.f32.mxu0 0.0
    %361 = vmatmul.mubr.f32.gmra.mxu0 %v291
    %v362 = vpop.f32.mrf.mxu0
    %v363 = vadd.f32 %v255, %v362
    %v364 = vpop.f32.mrf.mxu0
    %365 = vdwg.mxu0
    %vm366 = vcmask 58368
    %367 = vst.msk [vmem:[#allocation5] sm:$0x3] %vm366, %v363
    // Predicated region
    $region34: #{tpu_custom_call.1} parent=1 // pred_check
      _
    $region35: #{tpu_custom_call.1} parent=1 // pred_check_branch
      %369 = sbr.rel (0) target = $region37
    $region36: #{tpu_custom_call.1} parent=1 // pred_region
      %s371 = ssub.s32 32, 32
      %372 = vsyncadd [#allocation4], %s371
      %s374 = sshll.u32 [#allocation5], 4
      %s375 = int_to_ptr.vmem [resolvable:$true] %s374
      %377 = dma.vmem_to_hbm [thread:$0]  %s375, 32, %s7, [#allocation4]
    $region37: #{tpu_custom_call.1} parent=1 // pred_fallthru
      _
    // Predicated region
    $region38: #{tpu_custom_call.1} parent=1 // pred_check
      _
    $region39: #{tpu_custom_call.1} parent=1 // pred_check_branch
      %379 = sbr.rel (0) target = $region41
    $region40: #{tpu_custom_call.1} parent=1 // pred_region
      %380 = dma.done [#allocation4], 32
    $region41: #{tpu_custom_call.1} parent=1 // pred_fallthru
      _
    %381 = vsyncpa [#allocation3], 1
    %382 = vsyncpa [#allocation4], 1

</llo_original>
